<compile_context>
chip_gen: v6e
topology: v6e:2x2x1
jax: 0.10.0
libtpu: 0.0.40
codegen_flags: <defaults>
</compile_context>

<pallas_src>
import functools

import jax
import jax.numpy as jnp
from jax.experimental import pallas as pl
from jax.experimental.pallas import tpu as pltpu


def attention_kernel(feat_ref, ctx_ref, mask_ref, wfc_ref, bfc_ref,
                     wfa_ref, bfa_ref, out_ref):
    TBS, H2 = feat_ref.shape          # TB*S, 2H
    TB = ctx_ref.shape[0]
    S = TBS // TB

    feat = feat_ref[...]              # [TB*S, 2H] f32 -- the only big HBM read

    # fc(feature): bf16 in-register operands for the MXU, f32 accumulation.
    z = jnp.dot(feat.astype(jnp.bfloat16),
                wfc_ref[...].astype(jnp.bfloat16),
                preferred_element_type=jnp.float32) + bfc_ref[...]      # [TB*S, H]
    h = jnp.tanh(z)

    # fa(contexts): tiny f32 matmul, M = TB (not a degenerate M=1 matmul).
    c = jnp.dot(ctx_ref[...], wfa_ref[...],
                preferred_element_type=jnp.float32) + bfa_ref[...]      # [TB, H]

    # Attention logits in the flat layout: G[b, j] = c[b, :] . h[j, :]
    # (only the S columns of batch b's own block are meaningful).
    # trans-B dot_general -> MXU, no reshapes / transposes of h.
    G = jax.lax.dot_general(c, h, (((1,), (1,)), ((), ())),
                            preferred_element_type=jnp.float32)         # [TB, TB*S]

    row = jax.lax.broadcasted_iota(jnp.int32, (TB, TBS), 0)
    col = jax.lax.broadcasted_iota(jnp.int32, (TB, TBS), 1)
    in_block = (col >= row * S) & (col < (row + 1) * S)                 # block-diag selector
    valid = in_block & (mask_ref[...] > 0.0)                            # masks are binary {0,1}

    # Masked, numerically stable softmax over each row's own S lanes.
    # in-block masked lanes -> -1e9 (same as the reference formula for 0/1 masks),
    # out-of-block lanes -> -2e9 so they never win even when a row is fully masked.
    logits = jnp.where(valid, G, jnp.where(in_block, -1e9, -2e9))
    logits = logits - jnp.max(logits, axis=-1, keepdims=True)
    e = jnp.exp(logits)                                                 # invalid lanes -> exactly 0
    p = e * pl.reciprocal(jnp.sum(e, axis=-1, keepdims=True), approx=True)

    # p IS the block-diagonal probability matrix [TB, TB*S]:
    # the weighted sum is a single MXU matmul against the f32 feature block.
    out_ref[...] = jnp.dot(p, feat, preferred_element_type=jnp.float32)  # [TB, 2H]


def _pick_block_b(B, S):
    # TB*S ~= 256 rows per step fills the 256-row MXU on v6e/v7x (v5e simply
    # runs two 128-row passes).  Keeps TB a multiple of 8 and the flat-mask
    # block (1, TB*S) lane-aligned (TB*S % 128 == 0) whenever the batch is
    # split into more than one block.  For much larger B one would grow TB
    # further (the [TB, TB*S] intermediates stay cheap up to TB ~ 128).
    tb = min(B, max(8, -(-256 // S)))
    tb = max(8, (tb // 8) * 8)
    if tb >= B:
        return B
    while (tb * S) % 128 != 0 and tb < B:
        tb += 8
    return min(tb, B)


@functools.partial(jax.jit, static_argnames=("block_b",))
def attention_pallas(feature, contexts, masks, w_fc, b_fc, w_fa, b_fa,
                     *, block_b=None):
    B, S, H2 = feature.shape
    H = w_fc.shape[1]

    TB = _pick_block_b(B, S) if block_b is None else min(block_b, B)
    Bp = pl.cdiv(B, TB) * TB

    # Free (contiguous) reshapes -- no extra HBM passes, no extra dispatches.
    feat2d = feature.reshape(B * S, H2)
    mask1d = masks.reshape(1, B * S)
    ctx = contexts

    if Bp != B:  # pad batch only when needed so every block is full
        pad = Bp - B
        feat2d = jnp.pad(feat2d, ((0, pad * S), (0, 0)))
        ctx = jnp.pad(ctx, ((0, pad), (0, 0)))
        mask1d = jnp.pad(mask1d, ((0, 0), (0, pad * S)))

    out = pl.pallas_call(
        attention_kernel,
        out_shape=jax.ShapeDtypeStruct((Bp, H2), jnp.float32),
        grid_spec=pltpu.PrefetchScalarGridSpec(
            num_scalar_prefetch=0,
            grid=(Bp // TB,),
            in_specs=[
                pl.BlockSpec((TB * S, H2), lambda i: (i, 0)),  # feature (flat, f32)
                pl.BlockSpec((TB, H2),     lambda i: (i, 0)),  # contexts
                pl.BlockSpec((1, TB * S),  lambda i: (0, i)),  # masks (flat)
                pl.BlockSpec((H2, H),      lambda i: (0, 0)),  # W_fc
                pl.BlockSpec((1, H),       lambda i: (0, 0)),  # b_fc
                pl.BlockSpec((H2, H),      lambda i: (0, 0)),  # W_fa
                pl.BlockSpec((1, H),       lambda i: (0, 0)),  # b_fa
            ],
            out_specs=pl.BlockSpec((TB, H2), lambda i: (i, 0)),
        ),
        compiler_params=pltpu.CompilerParams(
            dimension_semantics=("parallel",),
        ),
    )(feat2d, ctx, mask1d, w_fc, b_fc.reshape(1, H), w_fa, b_fa.reshape(1, H))

    return out if Bp == B else out[:B]


def attention_reference(feature, contexts, masks, w_fc, b_fc, w_fa, b_fa):
    # pure-JAX f32 mirror of the PyTorch forward
    h = jnp.tanh(feature @ w_fc + b_fc)                   # [B, S, H]
    c = contexts @ w_fa + b_fa                            # [B, H]
    ratio = jnp.einsum('bsh,bh->bs', h, c)                # [B, S] (torch max over singleton dim)
    masked = ratio * masks + (masks - 1.0) * 1e9
    p = jax.nn.softmax(masked, axis=-1)
    return jnp.einsum('bs,bsd->bd', p, feature)           # [B, 2H]


def attention_reference_matched(feature, contexts, masks, w_fc, b_fc, w_fa, b_fa):
    # mirrors the kernel numerics: bf16 operands only for the fc matmul,
    # everything else (fa, logits, softmax, weighted sum) in f32.
    h = jnp.tanh(jnp.einsum('bsk,kh->bsh',
                            feature.astype(jnp.bfloat16),
                            w_fc.astype(jnp.bfloat16),
                            preferred_element_type=jnp.float32) + b_fc)
    c = contexts @ w_fa + b_fa
    ratio = jnp.einsum('bsh,bh->bs', h, c)
    masked = jnp.where(masks > 0.0, ratio, -1e9)
    p = jax.nn.softmax(masked, axis=-1)
    return jnp.einsum('bs,bsd->bd', p, feature)


if __name__ == "__main__":
    B, S, H = 64, 8, 32     # TB=32 -> TB*S=256 MXU rows, grid=2 ("parallel" on v7x)
    H2 = 2 * H

    key = jax.random.PRNGKey(0)
    k1, k2, k3, k4, k5, k6, k7 = jax.random.split(key, 7)

    feature = jax.random.normal(k1, (B, S, H2), dtype=jnp.float32)
    contexts = jax.random.normal(k2, (B, H2), dtype=jnp.float32)
    # masks: per-row valid lengths in [1, S] (trailing padding masked out)
    lens = jax.random.randint(k7, (B,), 1, S + 1)
    masks = (jnp.arange(S)[None, :] < lens[:, None]).astype(jnp.float32)

    # deterministic parameter init (Linear(2H -> H) x2), stored as [in, out]
    scale = 1.0 / jnp.sqrt(jnp.float32(H2))
    w_fc = jax.random.uniform(k3, (H2, H), jnp.float32, -scale, scale)
    b_fc = jax.random.uniform(k4, (H,), jnp.float32, -scale, scale)
    w_fa = jax.random.uniform(k5, (H2, H), jnp.float32, -scale, scale)
    b_fa = jax.random.uniform(k6, (H,), jnp.float32, -scale, scale)

    out = attention_pallas(feature, contexts, masks, w_fc, b_fc, w_fa, b_fa)
    out = jax.block_until_ready(out)
    assert out.shape == (B, H2)

    # tight check against a reference with matched (bf16 fc-matmul) numerics
    ref_matched = attention_reference_matched(
        feature, contexts, masks, w_fc, b_fc, w_fa, b_fa)
    assert jnp.allclose(out, ref_matched, atol=1e-2, rtol=1e-2), \
        "mismatch vs matched-precision reference"

    # sanity check against the full-f32 PyTorch-equivalent reference
    ref_f32 = attention_reference(feature, contexts, masks, w_fc, b_fc, w_fa, b_fa)
    assert jnp.allclose(out, ref_f32, atol=3e-2, rtol=3e-2), \
        "mismatch vs f32 reference"

    print("KERNEL_OK")
</pallas_src>

<mosaic_0001>
module attributes {stable_mosaic.version = 11 : i64} {
  func.func @attention_kernel(%arg0: i32, %arg1: memref<256x64xf32, #tpu.memory_space<vmem>>, %arg2: memref<32x64xf32, #tpu.memory_space<vmem>>, %arg3: memref<1x256xf32, #tpu.memory_space<vmem>>, %arg4: memref<64x32xf32, #tpu.memory_space<vmem>>, %arg5: memref<1x32xf32, #tpu.memory_space<vmem>>, %arg6: memref<64x32xf32, #tpu.memory_space<vmem>>, %arg7: memref<1x32xf32, #tpu.memory_space<vmem>>, %arg8: memref<32x64xf32, #tpu.memory_space<vmem>>) attributes {dimension_semantics = [#tpu.dimension_semantics<parallel>], iteration_bounds = array<i64: 2>, scalar_prefetch = 0 : i64, scratch_operands = 0 : i64, tpu.core_type = #tpu.core_type<tc>, window_params = [{transform_indices = @transform_0, window_bounds = array<i64: 256, 64>}, {transform_indices = @transform_1, window_bounds = array<i64: 32, 64>}, {transform_indices = @transform_2, window_bounds = array<i64: 1, 256>}, {pipeline_mode = #tpu.pipeline_mode<synchronous>, transform_indices = @transform_3, window_bounds = array<i64: 64, 32>}, {pipeline_mode = #tpu.pipeline_mode<synchronous>, transform_indices = @transform_4, window_bounds = array<i64: 1, 32>}, {pipeline_mode = #tpu.pipeline_mode<synchronous>, transform_indices = @transform_5, window_bounds = array<i64: 64, 32>}, {pipeline_mode = #tpu.pipeline_mode<synchronous>, transform_indices = @transform_6, window_bounds = array<i64: 1, 32>}, {transform_indices = @transform_7, window_bounds = array<i64: 32, 64>}]} {
    %c0 = arith.constant 0 : index
    %c0_0 = arith.constant 0 : index
    %0 = vector.load %arg1[%c0, %c0_0] : memref<256x64xf32, #tpu.memory_space<vmem>>, vector<256x64xf32>
    %1 = arith.truncf %0 : vector<256x64xf32> to vector<256x64xbf16>
    %c0_1 = arith.constant 0 : index
    %c0_2 = arith.constant 0 : index
    %2 = vector.load %arg4[%c0_1, %c0_2] : memref<64x32xf32, #tpu.memory_space<vmem>>, vector<64x32xf32>
    %3 = arith.truncf %2 : vector<64x32xf32> to vector<64x32xbf16>
    %cst = arith.constant dense<0.000000e+00> : vector<256x32xf32>
    %4 = tpu.matmul %1, %3, %cst {dimension_numbers = #tpu.dot_dimension_numbers<[1], [0], [0], [1], [0, 0, 1, 1], [], []>} : vector<256x64xbf16>, vector<64x32xbf16>, vector<256x32xf32> -> vector<256x32xf32>
    %c0_3 = arith.constant 0 : index
    %c0_4 = arith.constant 0 : index
    %5 = vector.load %arg5[%c0_3, %c0_4] : memref<1x32xf32, #tpu.memory_space<vmem>>, vector<1x32xf32>
    %6 = vector.broadcast %5 : vector<1x32xf32> to vector<256x32xf32>
    %7 = arith.addf %4, %6 : vector<256x32xf32>
    %8 = math.tanh %7 : vector<256x32xf32>
    %c0_5 = arith.constant 0 : index
    %c0_6 = arith.constant 0 : index
    %9 = vector.load %arg2[%c0_5, %c0_6] : memref<32x64xf32, #tpu.memory_space<vmem>>, vector<32x64xf32>
    %c0_7 = arith.constant 0 : index
    %c0_8 = arith.constant 0 : index
    %10 = vector.load %arg6[%c0_7, %c0_8] : memref<64x32xf32, #tpu.memory_space<vmem>>, vector<64x32xf32>
    %cst_9 = arith.constant dense<0.000000e+00> : vector<32x32xf32>
    %11 = tpu.matmul %9, %10, %cst_9 {dimension_numbers = #tpu.dot_dimension_numbers<[1], [0], [0], [1], [0, 0, 1, 1], [], []>} : vector<32x64xf32>, vector<64x32xf32>, vector<32x32xf32> -> vector<32x32xf32>
    %c0_10 = arith.constant 0 : index
    %c0_11 = arith.constant 0 : index
    %12 = vector.load %arg7[%c0_10, %c0_11] : memref<1x32xf32, #tpu.memory_space<vmem>>, vector<1x32xf32>
    %13 = vector.broadcast %12 : vector<1x32xf32> to vector<32x32xf32>
    %14 = arith.addf %11, %13 : vector<32x32xf32>
    %cst_12 = arith.constant dense<0.000000e+00> : vector<32x256xf32>
    %15 = tpu.matmul %14, %8, %cst_12 {dimension_numbers = #tpu.dot_dimension_numbers<[1], [1], [0], [0], [0, 0, 1, 0], [], []>} : vector<32x32xf32>, vector<256x32xf32>, vector<32x256xf32> -> vector<32x256xf32>
    %16 = tpu.iota {dimensions = array<i32: 0>} : vector<32x256xi32>
    %17 = tpu.iota {dimensions = array<i32: 1>} : vector<32x256xi32>
    %c8_i32 = arith.constant 8 : i32
    %18 = vector.broadcast %c8_i32 : i32 to vector<32x256xi32>
    %19 = arith.muli %16, %18 : vector<32x256xi32>
    %20 = arith.cmpi sge, %17, %19 : vector<32x256xi32>
    %c1_i32 = arith.constant 1 : i32
    %21 = vector.broadcast %c1_i32 : i32 to vector<32x256xi32>
    %22 = arith.addi %16, %21 : vector<32x256xi32>
    %c8_i32_13 = arith.constant 8 : i32
    %23 = vector.broadcast %c8_i32_13 : i32 to vector<32x256xi32>
    %24 = arith.muli %22, %23 : vector<32x256xi32>
    %25 = arith.cmpi slt, %17, %24 : vector<32x256xi32>
    %26 = arith.andi %20, %25 : vector<32x256xi1>
    %c0_14 = arith.constant 0 : index
    %c0_15 = arith.constant 0 : index
    %27 = vector.load %arg3[%c0_14, %c0_15] : memref<1x256xf32, #tpu.memory_space<vmem>>, vector<1x256xf32>
    %cst_16 = arith.constant 0.000000e+00 : f32
    %28 = vector.broadcast %cst_16 : f32 to vector<1x256xf32>
    %29 = arith.cmpf ogt, %27, %28 : vector<1x256xf32>
    %30 = vector.broadcast %29 : vector<1x256xi1> to vector<32x256xi1>
    %31 = arith.andi %26, %30 : vector<32x256xi1>
    %cst_17 = arith.constant -1.000000e+09 : f32
    %cst_18 = arith.constant -2.000000e+09 : f32
    %32 = vector.broadcast %cst_17 : f32 to vector<32x256xf32>
    %33 = vector.broadcast %cst_18 : f32 to vector<32x256xf32>
    %34 = arith.select %26, %32, %33 : vector<32x256xi1>, vector<32x256xf32>
    %35 = arith.select %31, %15, %34 : vector<32x256xi1>, vector<32x256xf32>
    %cst_19 = arith.constant dense<0xFF800000> : vector<32xf32>
    %36 = vector.multi_reduction <maximumf>, %35, %cst_19 [1] : vector<32x256xf32> to vector<32xf32>
    %37 = vector.shape_cast %36 : vector<32xf32> to vector<32x1xf32>
    %38 = vector.broadcast %37 : vector<32x1xf32> to vector<32x256xf32>
    %39 = arith.subf %35, %38 : vector<32x256xf32>
    %40 = math.exp %39 : vector<32x256xf32>
    %cst_20 = arith.constant dense<0.000000e+00> : vector<32xf32>
    %41 = vector.multi_reduction <add>, %40, %cst_20 [1] : vector<32x256xf32> to vector<32xf32>
    %42 = vector.shape_cast %41 : vector<32xf32> to vector<32x1xf32>
    %43 = tpu.reciprocal %42 {approx = true} : vector<32x1xf32> -> vector<32x1xf32>
    %44 = vector.broadcast %43 : vector<32x1xf32> to vector<32x256xf32>
    %45 = arith.mulf %40, %44 : vector<32x256xf32>
    %cst_21 = arith.constant dense<0.000000e+00> : vector<32x64xf32>
    %46 = tpu.matmul %45, %0, %cst_21 {dimension_numbers = #tpu.dot_dimension_numbers<[1], [0], [0], [1], [0, 0, 1, 1], [], []>} : vector<32x256xf32>, vector<256x64xf32>, vector<32x64xf32> -> vector<32x64xf32>
    %c0_22 = arith.constant 0 : index
    %c0_23 = arith.constant 0 : index
    %47 = vector.load %arg8[%c0_22, %c0_23] : memref<32x64xf32, #tpu.memory_space<vmem>>, vector<32x64xf32>
    tpu.vector_store %arg8[%c0_22, %c0_23], %46 {strides = array<i32>} : memref<32x64xf32, #tpu.memory_space<vmem>>, vector<32x64xf32>,
    return
  }
  func.func @transform_0(%arg0: i32) -> (i32, i32) {
    %c0_i32 = arith.constant 0 : i32
    %c0_i32_0 = arith.constant 0 : i32
    return %arg0, %c0_i32 : i32, i32
  }
  func.func @transform_1(%arg0: i32) -> (i32, i32) {
    %c0_i32 = arith.constant 0 : i32
    %c0_i32_0 = arith.constant 0 : i32
    return %arg0, %c0_i32 : i32, i32
  }
  func.func @transform_2(%arg0: i32) -> (i32, i32) {
    %c0_i32 = arith.constant 0 : i32
    %c0_i32_0 = arith.constant 0 : i32
    return %c0_i32, %arg0 : i32, i32
  }
  func.func @transform_3(%arg0: i32) -> (i32, i32) {
    %c0_i32 = arith.constant 0 : i32
    %c0_i32_0 = arith.constant 0 : i32
    %c0_i32_1 = arith.constant 0 : i32
    return %c0_i32, %c0_i32_0 : i32, i32
  }
  func.func @transform_4(%arg0: i32) -> (i32, i32) {
    %c0_i32 = arith.constant 0 : i32
    %c0_i32_0 = arith.constant 0 : i32
    %c0_i32_1 = arith.constant 0 : i32
    return %c0_i32, %c0_i32_0 : i32, i32
  }
  func.func @transform_5(%arg0: i32) -> (i32, i32) {
    %c0_i32 = arith.constant 0 : i32
    %c0_i32_0 = arith.constant 0 : i32
    %c0_i32_1 = arith.constant 0 : i32
    return %c0_i32, %c0_i32_0 : i32, i32
  }
  func.func @transform_6(%arg0: i32) -> (i32, i32) {
    %c0_i32 = arith.constant 0 : i32
    %c0_i32_0 = arith.constant 0 : i32
    %c0_i32_1 = arith.constant 0 : i32
    return %c0_i32, %c0_i32_0 : i32, i32
  }
  func.func @transform_7(%arg0: i32) -> (i32, i32) {
    %c0_i32 = arith.constant 0 : i32
    %c0_i32_0 = arith.constant 0 : i32
    return %arg0, %c0_i32 : i32, i32
  }
}

</mosaic_0001>

<llo_original>
// kernel: attention_pallas.1
$region0: #{attention_pallas.1}
  #allocation0 [shape = 'u32[]', space=smem, size = 0x4, offset = 0x4, fixed_abs, tag = 'smem constant byte address 0x4 - core index']
  #allocation1 [shape = 'u32[144,128]{1,0:T(1,128)}', space=vmem, size = 0x12000, scoped, tag = 'internal scratch']
  %s0 = inlined_call_operand.hbm [shape: f32[512,64], index: 0, kind: input, shape index: {}]
  %s1 = inlined_call_operand.vmem [shape: f32[64,64], index: 1, kind: input, shape index: {}]
  %s2 = inlined_call_operand.vmem [shape: f32[1,512], index: 2, kind: input, shape index: {}]
  %s3 = inlined_call_operand.vmem [shape: f32[64,32], index: 3, kind: input, shape index: {}]
  %s4 = inlined_call_operand.vmem [shape: f32[1,32], index: 4, kind: input, shape index: {}]
  %s5 = inlined_call_operand.vmem [shape: f32[64,32], index: 5, kind: input, shape index: {}]
  %s6 = inlined_call_operand.vmem [shape: f32[1,32], index: 6, kind: input, shape index: {}]
  %s7 = inlined_call_operand.hbm [shape: f32[64,64], index: 7, kind: output, shape index: {}]
  %s8 = sld [smem:[#allocation0]]
  $region65: #{attention_pallas.1} parent=0
    _
  %s10 = ssub.s32 1, %s8
  %s11 = scalar_select 0, %s10, %s8
  $region1: #{attention_pallas.1} parent=0
    #allocation2 [shape = 'u8[262144]{0}', space=vmem, size = 0x40000, scoped, tag = 'input window, operand 0']
    #allocation3 [shape = 's32[2]{0}', space=sflag, size = 0x8, scoped, tag = 'scoped memory for attention_pallas.1']
    #allocation4 [shape = 's32[2]{0}', space=sflag, size = 0x8, scoped, tag = 'scoped memory for attention_pallas.1']
    #allocation5 [shape = 'u8[32768]{0}', space=vmem, size = 0x8000, scoped, tag = 'output window, operand 0']
    %12 = vsyncpa [#allocation3], 0
    %s13 = scalar_lea.sflag [#allocation3], 1
    %14 = vsyncpa %s13, 0
    %15 = vsyncpa [#allocation4], 0
    %s16 = scalar_lea.sflag [#allocation4], 1
    %17 = vsyncpa %s16, 0
    loop: start=0, step=1, limit=4
    $region2: #{attention_pallas.1} parent=1 // loop_pre_header
      _
    $region3: #{attention_pallas.1} parent=1 // loop_header
      %s19 = sphi 0, %s23
      %p20 = scmp.ge.s32.totalorder %s19, 4
      %s29 = sphi 0, %s31
      %s32 = sphi 0, %s29
      %s33 = sphi 0, %s32
      %s49 = sphi 0, %s33
      %s55 = sphi 0, %s57
      %s58 = sphi 0, %s55
      %s59 = sphi 0, %s58
      %s75 = sphi 0, %s59
      %s81 = sphi 0, %s83
      %s84 = sphi 0, %s81
      %s85 = sphi 0, %s84
      %s101 = sphi 0, %s85
      %s105 = sphi 0, %s105
      %s107 = sphi 0, %s105
      %s108 = sphi 0, %s107
      %s122 = sphi 0, %s108
      %s126 = sphi 0, %s126
      %s128 = sphi 0, %s126
      %s129 = sphi 0, %s128
      %s143 = sphi 0, %s129
      %s147 = sphi 0, %s147
      %s149 = sphi 0, %s147
      %s150 = sphi 0, %s149
      %s164 = sphi 0, %s150
      %s168 = sphi 0, %s168
      %s170 = sphi 0, %s168
      %s171 = sphi 0, %s170
      %s185 = sphi 0, %s171
      %s191 = sphi 0, %s193
      %s194 = sphi 0, %s191
      %s195 = sphi 0, %s194
      %s211 = sphi 0, %s195
    $region4: #{attention_pallas.1} parent=1 // loop_header_branch
      %22 = sbr.rel (%p20) target = $region8
    $region5: #{attention_pallas.1} parent=1 // loop_body
      %s24 = ssub.s32 %s19, 1
      %s25 = ssub.s32 %s19, 2
      %s26 = sadd.s32 %s19, 1
      %s27 = ssub.s32 %s19, %s26
      %p28 = scmp.eq.s32.totalorder %s27, 0
      %s30 = sadd.s32 %s29, 1
      %s31 = scalar_select %p28, %s29, %s30
      %p34 = pneg %p28
      %p35 = scmp.eq.s32.totalorder %s19, 1
      %p36 = por %p34, %p35
      %p37 = scmp.ne.s32.totalorder %s29, %s32
      %p38 = scmp.eq.s32.totalorder %s19, 0
      %p39 = por %p37, %p38
      %p40 = scmp.ne.s32.totalorder %s29, %s32
      %p41 = scmp.eq.s32.totalorder %s24, 1
      %p42 = por %p40, %p41
      %p43 = scmp.ne.s32.totalorder %s32, %s33
      %p44 = scmp.eq.s32.totalorder %s24, 0
      %p45 = por %p43, %p44
      %p46 = scmp.ne.s32.totalorder %s32, %s33
      %p47 = scmp.eq.s32.totalorder %s25, 1
      %p48 = por %p46, %p47
      %p50 = scmp.ne.s32.totalorder %s33, %s49
      %p51 = scmp.eq.s32.totalorder %s25, 0
      %p52 = por %p50, %p51
      %s53 = ssub.s32 %s19, %s26
      %p54 = scmp.eq.s32.totalorder %s53, 0
      %s56 = sadd.s32 %s55, 1
      %s57 = scalar_select %p54, %s55, %s56
      %p60 = pneg %p54
      %p61 = scmp.eq.s32.totalorder %s19, 1
      %p62 = por %p60, %p61
      %p63 = scmp.ne.s32.totalorder %s55, %s58
      %p64 = scmp.eq.s32.totalorder %s19, 0
      %p65 = por %p63, %p64
      %p66 = scmp.ne.s32.totalorder %s55, %s58
      %p67 = scmp.eq.s32.totalorder %s24, 1
      %p68 = por %p66, %p67
      %p69 = scmp.ne.s32.totalorder %s58, %s59
      %p70 = scmp.eq.s32.totalorder %s24, 0
      %p71 = por %p69, %p70
      %p72 = scmp.ne.s32.totalorder %s58, %s59
      %p73 = scmp.eq.s32.totalorder %s25, 1
      %p74 = por %p72, %p73
      %p76 = scmp.ne.s32.totalorder %s59, %s75
      %p77 = scmp.eq.s32.totalorder %s25, 0
      %p78 = por %p76, %p77
      %s79 = ssub.s32 %s19, %s26
      %p80 = scmp.eq.s32.totalorder %s79, 0
      %s82 = sadd.s32 %s81, 1
      %s83 = scalar_select %p80, %s81, %s82
      %p86 = pneg %p80
      %p87 = scmp.eq.s32.totalorder %s19, 1
      %p88 = por %p86, %p87
      %p89 = scmp.ne.s32.totalorder %s81, %s84
      %p90 = scmp.eq.s32.totalorder %s19, 0
      %p91 = por %p89, %p90
      %p92 = scmp.ne.s32.totalorder %s81, %s84
      %p93 = scmp.eq.s32.totalorder %s24, 1
      %p94 = por %p92, %p93
      %p95 = scmp.ne.s32.totalorder %s84, %s85
      %p96 = scmp.eq.s32.totalorder %s24, 0
      %p97 = por %p95, %p96
      %p98 = scmp.ne.s32.totalorder %s84, %s85
      %p99 = scmp.eq.s32.totalorder %s25, 1
      %p100 = por %p98, %p99
      %p102 = scmp.ne.s32.totalorder %s85, %s101
      %p103 = scmp.eq.s32.totalorder %s25, 0
      %p104 = por %p102, %p103
      %s106 = sadd.s32 %s105, 1
      %p109 = scmp.eq.s32.totalorder %s19, 1
      %p110 = scmp.ne.s32.totalorder %s105, %s107
      %p111 = scmp.eq.s32.totalorder %s19, 0
      %p112 = por %p110, %p111
      %p113 = scmp.ne.s32.totalorder %s105, %s107
      %p114 = scmp.eq.s32.totalorder %s24, 1
      %p115 = por %p113, %p114
      %p116 = scmp.ne.s32.totalorder %s107, %s108
      %p117 = scmp.eq.s32.totalorder %s24, 0
      %p118 = por %p116, %p117
      %p119 = scmp.ne.s32.totalorder %s107, %s108
      %p120 = scmp.eq.s32.totalorder %s25, 1
      %p121 = por %p119, %p120
      %p123 = scmp.ne.s32.totalorder %s108, %s122
      %p124 = scmp.eq.s32.totalorder %s25, 0
      %p125 = por %p123, %p124
      %s127 = sadd.s32 %s126, 1
      %p130 = scmp.eq.s32.totalorder %s19, 1
      %p131 = scmp.ne.s32.totalorder %s126, %s128
      %p132 = scmp.eq.s32.totalorder %s19, 0
      %p133 = por %p131, %p132
      %p134 = scmp.ne.s32.totalorder %s126, %s128
      %p135 = scmp.eq.s32.totalorder %s24, 1
      %p136 = por %p134, %p135
      %p137 = scmp.ne.s32.totalorder %s128, %s129
      %p138 = scmp.eq.s32.totalorder %s24, 0
      %p139 = por %p137, %p138
      %p140 = scmp.ne.s32.totalorder %s128, %s129
      %p141 = scmp.eq.s32.totalorder %s25, 1
      %p142 = por %p140, %p141
      %p144 = scmp.ne.s32.totalorder %s129, %s143
      %p145 = scmp.eq.s32.totalorder %s25, 0
      %p146 = por %p144, %p145
      %s148 = sadd.s32 %s147, 1
      %p151 = scmp.eq.s32.totalorder %s19, 1
      %p152 = scmp.ne.s32.totalorder %s147, %s149
      %p153 = scmp.eq.s32.totalorder %s19, 0
      %p154 = por %p152, %p153
      %p155 = scmp.ne.s32.totalorder %s147, %s149
      %p156 = scmp.eq.s32.totalorder %s24, 1
      %p157 = por %p155, %p156
      %p158 = scmp.ne.s32.totalorder %s149, %s150
      %p159 = scmp.eq.s32.totalorder %s24, 0
      %p160 = por %p158, %p159
      %p161 = scmp.ne.s32.totalorder %s149, %s150
      %p162 = scmp.eq.s32.totalorder %s25, 1
      %p163 = por %p161, %p162
      %p165 = scmp.ne.s32.totalorder %s150, %s164
      %p166 = scmp.eq.s32.totalorder %s25, 0
      %p167 = por %p165, %p166
      %s169 = sadd.s32 %s168, 1
      %p172 = scmp.eq.s32.totalorder %s19, 1
      %p173 = scmp.ne.s32.totalorder %s168, %s170
      %p174 = scmp.eq.s32.totalorder %s19, 0
      %p175 = por %p173, %p174
      %p176 = scmp.ne.s32.totalorder %s168, %s170
      %p177 = scmp.eq.s32.totalorder %s24, 1
      %p178 = por %p176, %p177
      %p179 = scmp.ne.s32.totalorder %s170, %s171
      %p180 = scmp.eq.s32.totalorder %s24, 0
      %p181 = por %p179, %p180
      %p182 = scmp.ne.s32.totalorder %s170, %s171
      %p183 = scmp.eq.s32.totalorder %s25, 1
      %p184 = por %p182, %p183
      %p186 = scmp.ne.s32.totalorder %s171, %s185
      %p187 = scmp.eq.s32.totalorder %s25, 0
      %p188 = por %p186, %p187
      %s189 = ssub.s32 %s19, %s26
      %p190 = scmp.eq.s32.totalorder %s189, 0
      %s192 = sadd.s32 %s191, 1
      %s193 = scalar_select %p190, %s191, %s192
      %p196 = pneg %p190
      %p197 = scmp.eq.s32.totalorder %s19, 1
      %p198 = por %p196, %p197
      %p199 = scmp.ne.s32.totalorder %s191, %s194
      %p200 = scmp.eq.s32.totalorder %s19, 0
      %p201 = por %p199, %p200
      %p202 = scmp.ne.s32.totalorder %s191, %s194
      %p203 = scmp.eq.s32.totalorder %s24, 1
      %p204 = por %p202, %p203
      %p205 = scmp.ne.s32.totalorder %s194, %s195
      %p206 = scmp.eq.s32.totalorder %s24, 0
      %p207 = por %p205, %p206
      %p208 = scmp.ne.s32.totalorder %s194, %s195
      %p209 = scmp.eq.s32.totalorder %s25, 1
      %p210 = por %p208, %p209
      %p212 = scmp.ne.s32.totalorder %s195, %s211
      %p213 = scmp.eq.s32.totalorder %s25, 0
      %p214 = por %p212, %p213
      %p215 = scmp.le.s32.totalorder 1, %s19
      %p216 = scmp.lt.s32.totalorder %s19, 3
      %p217 = pnand %p215, %p216
      %p218 = pneg %p217
      // Predicated region
      $region9: #{attention_pallas.1} parent=5 // pred_check
        _
      $region10: #{attention_pallas.1} parent=5 // pred_check_branch
        %220 = sbr.rel (%p217) target = $region12
      $region11: #{attention_pallas.1} parent=5 // pred_region
        %s221 = ssub.s32 %s19, 1
        // Predicated region
        $region13: #{attention_pallas.1} parent=11 // pred_check
          %p222 = pneg %p118
        $region14: #{attention_pallas.1} parent=11 // pred_check_branch
          %224 = sbr.rel (%p222) target = $region16
        $region15: #{attention_pallas.1} parent=11 // pred_region
          _
        $region16: #{attention_pallas.1} parent=11 // pred_fallthru
          _
        // Predicated region
        $region17: #{attention_pallas.1} parent=11 // pred_check
          %p225 = pneg %p139
        $region18: #{attention_pallas.1} parent=11 // pred_check_branch
          %227 = sbr.rel (%p225) target = $region20
        $region19: #{attention_pallas.1} parent=11 // pred_region
          _
        $region20: #{attention_pallas.1} parent=11 // pred_fallthru
          _
        // Predicated region
        $region21: #{attention_pallas.1} parent=11 // pred_check
          %p228 = pneg %p160
        $region22: #{attention_pallas.1} parent=11 // pred_check_branch
          %230 = sbr.rel (%p228) target = $region24
        $region23: #{attention_pallas.1} parent=11 // pred_region
          _
        $region24: #{attention_pallas.1} parent=11 // pred_fallthru
          _
        // Predicated region
        $region25: #{attention_pallas.1} parent=11 // pred_check
          %p231 = pneg %p181
        $region26: #{attention_pallas.1} parent=11 // pred_check_branch
          %233 = sbr.rel (%p231) target = $region28
        $region27: #{attention_pallas.1} parent=11 // pred_region
          _
        $region28: #{attention_pallas.1} parent=11 // pred_fallthru
          _
      $region12: #{attention_pallas.1} parent=5 // pred_fallthru
        _
      %p234 = scmp.lt.s32.totalorder %s19, 2
      // Predicated region
      $region29: #{attention_pallas.1} parent=5 // pred_check
        %p235 = pneg %p234
      $region30: #{attention_pallas.1} parent=5 // pred_check_branch
        %237 = sbr.rel (%p235) target = $region32
      $region31: #{attention_pallas.1} parent=5 // pred_region
        // Predicated region
        $region33: #{attention_pallas.1} parent=31 // pred_check
          %p238 = pneg %p39
        $region34: #{attention_pallas.1} parent=31 // pred_check_branch
          %240 = sbr.rel (%p238) target = $region36
        $region35: #{attention_pallas.1} parent=31 // pred_region
          %s241 = sand.u32 %s29, 1
          %s242 = scalar_lea.sflag [#allocation3], %s241
          %s243 = sand.u32 %s29, 1
          %s244 = smul.addr %s243, 256
          %s245 = scalar_lea.vmem [#allocation2], %s244
          %s246 = smul.u32 32, %s19
          %s248 = ssub.s32 4096, 4096
          %249 = vsyncadd %s242, %s248
          %s250 = smul.addr %s246, 128
          %s251 = scalar_lea.hbm %s0, %s250
          %s252 = sshll.u32 %s245, 4
          %s253 = int_to_ptr.vmem [resolvable:$true] %s252
          %258 = dma.hbm_to_vmem [thread:$0]  %s251, 4096, %s253, %s242, 128, 128, 8
        $region36: #{attention_pallas.1} parent=31 // pred_fallthru
          _
        // Predicated region
        $region37: #{attention_pallas.1} parent=31 // pred_check
          %p259 = pneg %p65
        $region38: #{attention_pallas.1} parent=31 // pred_check_branch
          %261 = sbr.rel (%p259) target = $region40
        $region39: #{attention_pallas.1} parent=31 // pred_region
          %s262 = smul.u32 4, %s19
          %p263 = scmp.lt.s32.totalorder %s262, 7
          %s264 = scalar_select %p263, %s262, 7
          %s265 = smul.addr %s264, 8
          %s266 = scalar_lea.vmem %s1, %s265
          %s267 = smul.u32 4, %s19
        $region40: #{attention_pallas.1} parent=31 // pred_fallthru
          _
        // Predicated region
        $region41: #{attention_pallas.1} parent=31 // pred_check
          %p268 = pneg %p91
        $region42: #{attention_pallas.1} parent=31 // pred_check_branch
          %270 = sbr.rel (%p268) target = $region44
        $region43: #{attention_pallas.1} parent=31 // pred_region
          %s271 = smul.u32 2, %s19
          %p272 = scmp.lt.s32.totalorder %s271, 3
          %s273 = scalar_select %p272, %s271, 3
          %s274 = scalar_lea.vmem %s2, %s273
          %s275 = smul.u32 2, %s19
        $region44: #{attention_pallas.1} parent=31 // pred_fallthru
          _
      $region32: #{attention_pallas.1} parent=5 // pred_fallthru
        _
      %p276 = scmp.le.s32.totalorder 1, %s19
      %p277 = scmp.lt.s32.totalorder %s19, 3
      %p278 = pnand %p276, %p277
      %p279 = pneg %p278
      // Predicated region
      $region45: #{attention_pallas.1} parent=5 // pred_check
        _
      $region46: #{attention_pallas.1} parent=5 // pred_check_branch
        %281 = sbr.rel (%p278) target = $region48
      $region47: #{attention_pallas.1} parent=5 // pred_region
        %s282 = ssub.s32 %s19, 1
        %s283 = sand.u32 %s32, 1
        %s284 = scalar_lea.sflag [#allocation3], %s283
        %s285 = sand.u32 %s32, 1
        %s286 = smul.addr %s285, 256
        %s287 = scalar_lea.vmem [#allocation2], %s286
        // Predicated region
        $region49: #{attention_pallas.1} parent=47 // pred_check
          %p288 = pneg %p45
        $region50: #{attention_pallas.1} parent=47 // pred_check_branch
          %290 = sbr.rel (%p288) target = $region52
        $region51: #{attention_pallas.1} parent=47 // pred_region
          %291 = dma.done %s284, 4096
        $region52: #{attention_pallas.1} parent=47 // pred_fallthru
          _
        %s292 = sand.u32 %s32, 1
        %s293 = scalar_lea.sflag [#allocation3], %s292
        %s294 = sand.u32 %s32, 1
        %s295 = smul.addr %s294, 256
        %s296 = scalar_lea.vmem [#allocation2], %s295
        %p297 = pneg %p45
        %p298 = pneg %p42
        %s299 = smul.u32 4, %s24
        %p300 = scmp.lt.s32.totalorder %s299, 7
        %s301 = scalar_select %p300, %s299, 7
        %s302 = smul.addr %s301, 8
        %s303 = scalar_lea.vmem %s1, %s302
        %p304 = pneg %p71
        %p305 = pneg %p68
        %s306 = smul.u32 2, %s24
        %p307 = scmp.lt.s32.totalorder %s306, 3
        %s308 = scalar_select %p307, %s306, 3
        %s309 = scalar_lea.vmem %s2, %s308
        %p310 = pneg %p97
        %p311 = pneg %p94
        %p312 = pneg %p118
        %p313 = pneg %p115
        %p314 = pneg %p139
        %p315 = pneg %p136
        %p316 = pneg %p160
        %p317 = pneg %p157
        %p318 = pneg %p181
        %p319 = pneg %p178
        %p320 = pneg %p207
        %p321 = pneg %p204
        %s322 = sand.u32 %s194, 1
        %s323 = scalar_lea.sflag [#allocation4], %s322
        %s324 = sand.u32 %s194, 1
        %s325 = smul.addr %s324, 32
        %s326 = scalar_lea.vmem [#allocation5], %s325
        %s327 = smul.u32 32, %s24
        %s328 = smul.u32 4, %s24
        %p329 = scmp.lt.s32.totalorder %s328, 7
        %s330 = scalar_select %p329, %s328, 7
        %s331 = smul.addr %s330, 8
        %s332 = scalar_lea.vmem %s1, %s331
        %s333 = smul.u32 4, %s24
        %s334 = smul.u32 2, %s24
        %p335 = scmp.lt.s32.totalorder %s334, 3
        %s336 = scalar_select %p335, %s334, 3
        %s337 = scalar_lea.vmem %s2, %s336
        %s338 = smul.u32 2, %s24
        %s339 = smul.u32 4, %s24
        %v341 = vld [vmem:[%s287] sm:$0xff]
        %v342 = vld [vmem:[%s287 + $0x8] sm:$0xff]
        %v343 = vld [vmem:[%s287 + $0x10] sm:$0xff]
        %v344 = vld [vmem:[%s287 + $0x18] sm:$0xff]
        %v345 = vld [vmem:[%s287 + $0x20] sm:$0xff]
        %v346 = vld [vmem:[%s287 + $0x28] sm:$0xff]
        %v347 = vld [vmem:[%s287 + $0x30] sm:$0xff]
        %v348 = vld [vmem:[%s287 + $0x38] sm:$0xff]
        %v349 = vld [vmem:[%s287 + $0x40] sm:$0xff]
        %v350 = vld [vmem:[%s287 + $0x48] sm:$0xff]
        %v351 = vld [vmem:[%s287 + $0x50] sm:$0xff]
        %v352 = vld [vmem:[%s287 + $0x58] sm:$0xff]
        %v353 = vld [vmem:[%s287 + $0x60] sm:$0xff]
        %v354 = vld [vmem:[%s287 + $0x68] sm:$0xff]
        %v355 = vld [vmem:[%s287 + $0x70] sm:$0xff]
        %v356 = vld [vmem:[%s287 + $0x78] sm:$0xff]
        %v357 = vld [vmem:[%s287 + $0x80] sm:$0xff]
        %v358 = vld [vmem:[%s287 + $0x88] sm:$0xff]
        %v359 = vld [vmem:[%s287 + $0x90] sm:$0xff]
        %v360 = vld [vmem:[%s287 + $0x98] sm:$0xff]
        %v361 = vld [vmem:[%s287 + $0xa0] sm:$0xff]
        %v362 = vld [vmem:[%s287 + $0xa8] sm:$0xff]
        %v363 = vld [vmem:[%s287 + $0xb0] sm:$0xff]
        %v364 = vld [vmem:[%s287 + $0xb8] sm:$0xff]
        %v365 = vld [vmem:[%s287 + $0xc0] sm:$0xff]
        %v366 = vld [vmem:[%s287 + $0xc8] sm:$0xff]
        %v367 = vld [vmem:[%s287 + $0xd0] sm:$0xff]
        %v368 = vld [vmem:[%s287 + $0xd8] sm:$0xff]
        %v369 = vld [vmem:[%s287 + $0xe0] sm:$0xff]
        %v370 = vld [vmem:[%s287 + $0xe8] sm:$0xff]
        %v371 = vld [vmem:[%s287 + $0xf0] sm:$0xff]
        %v372 = vld [vmem:[%s287 + $0xf8] sm:$0xff]
        %v373 = vpack.c.bf16 %v342, %v341
        %v374 = vpack.c.bf16 %v344, %v343
        %v375 = vpack.c.bf16 %v346, %v345
        %v376 = vpack.c.bf16 %v348, %v347
        %v377 = vpack.c.bf16 %v350, %v349
        %v378 = vpack.c.bf16 %v352, %v351
        %v379 = vpack.c.bf16 %v354, %v353
        %v380 = vpack.c.bf16 %v356, %v355
        %v381 = vpack.c.bf16 %v358, %v357
        %v382 = vpack.c.bf16 %v360, %v359
        %v383 = vpack.c.bf16 %v362, %v361
        %v384 = vpack.c.bf16 %v364, %v363
        %v385 = vpack.c.bf16 %v366, %v365
        %v386 = vpack.c.bf16 %v368, %v367
        %v387 = vpack.c.bf16 %v370, %v369
        %v388 = vpack.c.bf16 %v372, %v371
        %v389 = vld [vmem:[%s3] sm:$0xff]
        %v390 = vld [vmem:[%s3 + $0x8] sm:$0xff]
        %v391 = vld [vmem:[%s3 + $0x10] sm:$0xff]
        %v392 = vld [vmem:[%s3 + $0x18] sm:$0xff]
        %v393 = vld [vmem:[%s3 + $0x20] sm:$0xff]
        %v394 = vld [vmem:[%s3 + $0x28] sm:$0xff]
        %v395 = vld [vmem:[%s3 + $0x30] sm:$0xff]
        %v396 = vld [vmem:[%s3 + $0x38] sm:$0xff]
        %v397 = vpack.c.bf16 %v390, %v389
        %v398 = vpack.c.bf16 %v392, %v391
        %v399 = vpack.c.bf16 %v394, %v393
        %v400 = vpack.c.bf16 %v396, %v395
        %v401 = vld [vmem:[%s4] sm:$0x1]
        %v403 = vlaneseq
        %v404 = vshrl.u32 %v403, 7
        %v405 = vsub.s32 0, %v404
        %v406 = vrot.slane %v401, %v405
        %vm408 = vcmask 523264
        %v410 = vsel %vm408, %v373, 0
        %v413 = vsel %vm408, %v374, 0
        %v416 = vsel %vm408, %v375, 0
        %v419 = vsel %vm408, %v376, 0
        %v422 = vsel %vm408, %v377, 0
        %v425 = vsel %vm408, %v378, 0
        %v428 = vsel %vm408, %v379, 0
        %v431 = vsel %vm408, %v380, 0
        %v434 = vsel %vm408, %v381, 0
        %v437 = vsel %vm408, %v382, 0
        %v440 = vsel %vm408, %v383, 0
        %v443 = vsel %vm408, %v384, 0
        %v446 = vsel %vm408, %v385, 0
        %v449 = vsel %vm408, %v386, 0
        %v452 = vsel %vm408, %v387, 0
        %v455 = vsel %vm408, %v388, 0
        %457 = vmatprep.subr.bf16.mxu0 0
        %458 = vmatpush1.bf16.msra.mxu0 0
        %459 = vmatprep.subr.bf16.mxu0 0
        %460 = vmatpush1.bf16.msra.mxu0 0
        %461 = vmatprep.subr.bf16.mxu0 0
        %462 = vmatpush1.bf16.msra.mxu0 0
        %463 = vmatprep.subr.bf16.mxu0 0
        %464 = vmatpush1.bf16.msra.mxu0 0
        %465 = vmatprep.subr.bf16.mxu0 0
        %466 = vmatpush1.bf16.msra.mxu0 %v400
        %467 = vmatprep.subr.bf16.mxu0 0
        %468 = vmatpush1.bf16.msra.mxu0 %v399
        %469 = vmatprep.subr.bf16.mxu0 0
        %470 = vmatpush1.bf16.msra.mxu0 %v398
        %471 = vmatprep.subr.bf16.mxu0 0
        %472 = vmatpush1.bf16.msra.mxu0 %v397
        %473 = vmatprep.subr.bf16.mxu0 0
        %474 = vmatpush2.bf16.msra.mxu0 0
        %475 = vmatprep.subr.bf16.mxu0 0
        %476 = vmatpush2.bf16.msra.mxu0 0
        %477 = vmatprep.subr.bf16.mxu0 0
        %478 = vmatpush2.bf16.msra.mxu0 0
        %479 = vmatprep.subr.bf16.mxu0 0
        %480 = vmatpush2.bf16.msra.mxu0 0
        %481 = vmatprep.subr.bf16.mxu0 0
        %482 = vmatpush2.bf16.msra.mxu0 0
        %483 = vmatprep.subr.bf16.mxu0 0
        %484 = vmatpush2.bf16.msra.mxu0 0
        %485 = vmatprep.subr.bf16.mxu0 0
        %486 = vmatpush2.bf16.msra.mxu0 0
        %487 = vmatprep.subr.bf16.mxu0 0
        %488 = vmatpush2.bf16.msra.mxu0 0
        %489 = vmatprep.mubr.bf16.mxu0 0
        %490 = vmatmul.mubr.bf16.gmra.mxu0 %v410
        %v491 = vpop.f32.mrf.mxu0
        %v492 = vadd.f32 %v406, %v491
        %v493 = vpop.f32.mrf.mxu0
        %v494 = vpop.f32.mrf.mxu0
        %v495 = vadd.f32 %v406, %v494
        %v496 = vpop.f32.mrf.mxu0
        %497 = vmatprep.mubr.bf16.mxu0 0
        %498 = vmatmul.mubr.bf16.gmra.mxu0 %v413
        %v499 = vpop.f32.mrf.mxu0
        %v500 = vadd.f32 %v406, %v499
        %v501 = vpop.f32.mrf.mxu0
        %v502 = vpop.f32.mrf.mxu0
        %v503 = vadd.f32 %v406, %v502
        %v504 = vpop.f32.mrf.mxu0
        %505 = vmatprep.mubr.bf16.mxu0 0
        %506 = vmatmul.mubr.bf16.gmra.mxu0 %v416
        %v507 = vpop.f32.mrf.mxu0
        %v508 = vadd.f32 %v406, %v507
        %v509 = vpop.f32.mrf.mxu0
        %v510 = vpop.f32.mrf.mxu0
        %v511 = vadd.f32 %v406, %v510
        %v512 = vpop.f32.mrf.mxu0
        %513 = vmatprep.mubr.bf16.mxu0 0
        %514 = vmatmul.mubr.bf16.gmra.mxu0 %v419
        %v515 = vpop.f32.mrf.mxu0
        %v516 = vadd.f32 %v406, %v515
        %v517 = vpop.f32.mrf.mxu0
        %v518 = vpop.f32.mrf.mxu0
        %v519 = vadd.f32 %v406, %v518
        %v520 = vpop.f32.mrf.mxu0
        %521 = vmatprep.mubr.bf16.mxu0 0
        %522 = vmatmul.mubr.bf16.gmra.mxu0 %v422
        %v523 = vpop.f32.mrf.mxu0
        %v524 = vadd.f32 %v406, %v523
        %v525 = vpop.f32.mrf.mxu0
        %v526 = vpop.f32.mrf.mxu0
        %v527 = vadd.f32 %v406, %v526
        %v528 = vpop.f32.mrf.mxu0
        %529 = vmatprep.mubr.bf16.mxu0 0
        %530 = vmatmul.mubr.bf16.gmra.mxu0 %v425
        %v531 = vpop.f32.mrf.mxu0
        %v532 = vadd.f32 %v406, %v531
        %v533 = vpop.f32.mrf.mxu0
        %v534 = vpop.f32.mrf.mxu0
        %v535 = vadd.f32 %v406, %v534
        %v536 = vpop.f32.mrf.mxu0
        %537 = vmatprep.mubr.bf16.mxu0 0
        %538 = vmatmul.mubr.bf16.gmra.mxu0 %v428
        %v539 = vpop.f32.mrf.mxu0
        %v540 = vadd.f32 %v406, %v539
        %v541 = vpop.f32.mrf.mxu0
        %v542 = vpop.f32.mrf.mxu0
        %v543 = vadd.f32 %v406, %v542
        %v544 = vpop.f32.mrf.mxu0
        %545 = vmatprep.mubr.bf16.mxu0 0
        %546 = vmatmul.mubr.bf16.gmra.mxu0 %v431
        %v547 = vpop.f32.mrf.mxu0
        %v548 = vadd.f32 %v406, %v547
        %v549 = vpop.f32.mrf.mxu0
        %v550 = vpop.f32.mrf.mxu0
        %v551 = vadd.f32 %v406, %v550
        %v552 = vpop.f32.mrf.mxu0
        %553 = vmatprep.mubr.bf16.mxu0 0
        %554 = vmatmul.mubr.bf16.gmra.mxu0 %v434
        %v555 = vpop.f32.mrf.mxu0
        %v556 = vadd.f32 %v406, %v555
        %v557 = vpop.f32.mrf.mxu0
        %v558 = vpop.f32.mrf.mxu0
        %v559 = vadd.f32 %v406, %v558
        %v560 = vpop.f32.mrf.mxu0
        %561 = vmatprep.mubr.bf16.mxu0 0
        %562 = vmatmul.mubr.bf16.gmra.mxu0 %v437
        %v563 = vpop.f32.mrf.mxu0
        %v564 = vadd.f32 %v406, %v563
        %v565 = vpop.f32.mrf.mxu0
        %v566 = vpop.f32.mrf.mxu0
        %v567 = vadd.f32 %v406, %v566
        %v568 = vpop.f32.mrf.mxu0
        %569 = vmatprep.mubr.bf16.mxu0 0
        %570 = vmatmul.mubr.bf16.gmra.mxu0 %v440
        %v571 = vpop.f32.mrf.mxu0
        %v572 = vadd.f32 %v406, %v571
        %v573 = vpop.f32.mrf.mxu0
        %v574 = vpop.f32.mrf.mxu0
        %v575 = vadd.f32 %v406, %v574
        %v576 = vpop.f32.mrf.mxu0
        %577 = vmatprep.mubr.bf16.mxu0 0
        %578 = vmatmul.mubr.bf16.gmra.mxu0 %v443
        %v579 = vpop.f32.mrf.mxu0
        %v580 = vadd.f32 %v406, %v579
        %v581 = vpop.f32.mrf.mxu0
        %v582 = vpop.f32.mrf.mxu0
        %v583 = vadd.f32 %v406, %v582
        %v584 = vpop.f32.mrf.mxu0
        %585 = vmatprep.mubr.bf16.mxu0 0
        %586 = vmatmul.mubr.bf16.gmra.mxu0 %v446
        %v587 = vpop.f32.mrf.mxu0
        %v588 = vadd.f32 %v406, %v587
        %v589 = vpop.f32.mrf.mxu0
        %v590 = vpop.f32.mrf.mxu0
        %v591 = vadd.f32 %v406, %v590
        %v592 = vpop.f32.mrf.mxu0
        %593 = vmatprep.mubr.bf16.mxu0 0
        %594 = vmatmul.mubr.bf16.gmra.mxu0 %v449
        %v595 = vpop.f32.mrf.mxu0
        %v596 = vadd.f32 %v406, %v595
        %v597 = vpop.f32.mrf.mxu0
        %v598 = vpop.f32.mrf.mxu0
        %v599 = vadd.f32 %v406, %v598
        %v600 = vpop.f32.mrf.mxu0
        %601 = vmatprep.mubr.bf16.mxu0 0
        %602 = vmatmul.mubr.bf16.gmra.mxu0 %v452
        %v603 = vpop.f32.mrf.mxu0
        %v604 = vadd.f32 %v406, %v603
        %v605 = vpop.f32.mrf.mxu0
        %v606 = vpop.f32.mrf.mxu0
        %v607 = vadd.f32 %v406, %v606
        %v608 = vpop.f32.mrf.mxu0
        %609 = vmatprep.mubr.bf16.mxu0 0
        %610 = vmatmul.mubr.bf16.gmra.mxu0 %v455
        %v611 = vpop.f32.mrf.mxu0
        %v612 = vadd.f32 %v406, %v611
        %v613 = vpop.f32.mrf.mxu0
        %v614 = vpop.f32.mrf.mxu0
        %v615 = vadd.f32 %v406, %v614
        %v616 = vpop.f32.mrf.mxu0
        %617 = vdwg.mxu0
        %v618 = vtanh.pop %v492
        %v619 = vtanh.pop %v495
        %v620 = vtanh.pop %v500
        %v621 = vtanh.pop %v503
        %v622 = vtanh.pop %v508
        %v623 = vtanh.pop %v511
        %v624 = vtanh.pop %v516
        %v625 = vtanh.pop %v519
        %v626 = vtanh.pop %v524
        %v627 = vtanh.pop %v527
        %v628 = vtanh.pop %v532
        %v629 = vtanh.pop %v535
        %v630 = vtanh.pop %v540
        %v631 = vtanh.pop %v543
        %v632 = vtanh.pop %v548
        %v633 = vtanh.pop %v551
        %v634 = vtanh.pop %v556
        %v635 = vtanh.pop %v559
        %v636 = vtanh.pop %v564
        %v637 = vtanh.pop %v567
        %v638 = vtanh.pop %v572
        %v639 = vtanh.pop %v575
        %v640 = vtanh.pop %v580
        %v641 = vtanh.pop %v583
        %v642 = vtanh.pop %v588
        %v643 = vtanh.pop %v591
        %v644 = vtanh.pop %v596
        %v645 = vtanh.pop %v599
        %v646 = vtanh.pop %v604
        %v647 = vtanh.pop %v607
        %v648 = vtanh.pop %v612
        %v649 = vtanh.pop %v615
        %v650 = vld [vmem:[%s332] sm:$0xff]
        %v651 = vld [vmem:[%s332 + $0x8] sm:$0xff]
        %v652 = vld [vmem:[%s332 + $0x10] sm:$0xff]
        %v653 = vld [vmem:[%s332 + $0x18] sm:$0xff]
        %v654 = vld [vmem:[%s5] sm:$0xff]
        %v655 = vld [vmem:[%s5 + $0x8] sm:$0xff]
        %v656 = vld [vmem:[%s5 + $0x10] sm:$0xff]
        %v657 = vld [vmem:[%s5 + $0x18] sm:$0xff]
        %v658 = vld [vmem:[%s5 + $0x20] sm:$0xff]
        %v659 = vld [vmem:[%s5 + $0x28] sm:$0xff]
        %v660 = vld [vmem:[%s5 + $0x30] sm:$0xff]
        %v661 = vld [vmem:[%s5 + $0x38] sm:$0xff]
        %v662 = vld [vmem:[%s6] sm:$0x1]
        %v664 = vlaneseq
        %v665 = vshrl.u32 %v664, 7
        %v666 = vsub.s32 0, %v665
        %v667 = vrot.slane %v662, %v666
        %v670 = vsel %vm408, %v650, 0
        %v673 = vsel %vm408, %v651, 0
        %v676 = vsel %vm408, %v652, 0
        %v679 = vsel %vm408, %v653, 0
        %681 = vmatprep.subr.mxu0 0.0
        %682 = vmatpush1.msra.mxu0 0.0
        %683 = vmatprep.subr.mxu0 0.0
        %684 = vmatpush1.msra.mxu0 0.0
        %685 = vmatprep.subr.mxu0 0.0
        %686 = vmatpush1.msra.mxu0 0.0
        %687 = vmatprep.subr.mxu0 0.0
        %688 = vmatpush1.msra.mxu0 0.0
        %689 = vmatprep.subr.mxu0 0.0
        %690 = vmatpush1.msra.mxu0 0.0
        %691 = vmatprep.subr.mxu0 0.0
        %692 = vmatpush1.msra.mxu0 0.0
        %693 = vmatprep.subr.mxu0 0.0
        %694 = vmatpush1.msra.mxu0 0.0
        %695 = vmatprep.subr.mxu0 0.0
        %696 = vmatpush1.msra.mxu0 0.0
        %697 = vmatprep.subr.mxu0 0.0
        %698 = vmatpush1.msra.mxu0 %v661
        %699 = vmatprep.subr.mxu0 0.0
        %700 = vmatpush1.msra.mxu0 %v660
        %701 = vmatprep.subr.mxu0 0.0
        %702 = vmatpush1.msra.mxu0 %v659
        %703 = vmatprep.subr.mxu0 0.0
        %704 = vmatpush1.msra.mxu0 %v658
        %705 = vmatprep.subr.mxu0 0.0
        %706 = vmatpush1.msra.mxu0 %v657
        %707 = vmatprep.subr.mxu0 0.0
        %708 = vmatpush1.msra.mxu0 %v656
        %709 = vmatprep.subr.mxu0 0.0
        %710 = vmatpush1.msra.mxu0 %v655
        %711 = vmatprep.subr.mxu0 0.0
        %712 = vmatpush1.msra.mxu0 %v654
        %713 = vmatprep.subr.mxu0 0.0
        %714 = vmatpush2.msra.mxu0 0.0
        %715 = vmatprep.subr.mxu0 0.0
        %716 = vmatpush2.msra.mxu0 0.0
        %717 = vmatprep.subr.mxu0 0.0
        %718 = vmatpush2.msra.mxu0 0.0
        %719 = vmatprep.subr.mxu0 0.0
        %720 = vmatpush2.msra.mxu0 0.0
        %721 = vmatprep.subr.mxu0 0.0
        %722 = vmatpush2.msra.mxu0 0.0
        %723 = vmatprep.subr.mxu0 0.0
        %724 = vmatpush2.msra.mxu0 0.0
        %725 = vmatprep.subr.mxu0 0.0
        %726 = vmatpush2.msra.mxu0 0.0
        %727 = vmatprep.subr.mxu0 0.0
        %728 = vmatpush2.msra.mxu0 0.0
        %729 = vmatprep.subr.mxu0 0.0
        %730 = vmatpush2.msra.mxu0 0.0
        %731 = vmatprep.subr.mxu0 0.0
        %732 = vmatpush2.msra.mxu0 0.0
        %733 = vmatprep.subr.mxu0 0.0
        %734 = vmatpush2.msra.mxu0 0.0
        %735 = vmatprep.subr.mxu0 0.0
        %736 = vmatpush2.msra.mxu0 0.0
        %737 = vmatprep.subr.mxu0 0.0
        %738 = vmatpush2.msra.mxu0 0.0
        %739 = vmatprep.subr.mxu0 0.0
        %740 = vmatpush2.msra.mxu0 0.0
        %741 = vmatprep.subr.mxu0 0.0
        %742 = vmatpush2.msra.mxu0 0.0
        %743 = vmatprep.subr.mxu0 0.0
        %744 = vmatpush2.msra.mxu0 0.0
        %745 = vmatprep.mubr.f32.mxu0 0.0
        %746 = vmatmul.mubr.f32.gmra.mxu0 %v670
        %v747 = vpop.f32.mrf.mxu0
        %v748 = vadd.f32 %v667, %v747
        %v749 = vpop.f32.mrf.mxu0
        %750 = vmatprep.mubr.f32.mxu0 0.0
        %751 = vmatmul.mubr.f32.gmra.mxu0 %v673
        %v752 = vpop.f32.mrf.mxu0
        %v753 = vadd.f32 %v667, %v752
        %v754 = vpop.f32.mrf.mxu0
        %755 = vmatprep.mubr.f32.mxu0 0.0
        %756 = vmatmul.mubr.f32.gmra.mxu0 %v676
        %v757 = vpop.f32.mrf.mxu0
        %v758 = vadd.f32 %v667, %v757
        %v759 = vpop.f32.mrf.mxu0
        %760 = vmatprep.mubr.f32.mxu0 0.0
        %761 = vmatmul.mubr.f32.gmra.mxu0 %v679
        %v762 = vpop.f32.mrf.mxu0
        %v763 = vadd.f32 %v667, %v762
        %v764 = vpop.f32.mrf.mxu0
        %765 = vdwg.mxu0
        %vm766 = vcmask 261120
        %v768 = vsel %vm766, %v748, 0
        %v771 = vsel %vm766, %v753, 0
        %v774 = vsel %vm766, %v758, 0
        %v777 = vsel %vm766, %v763, 0
        %v780 = vsel %vm766, %v618, 0
        %v783 = vsel %vm766, %v619, 0
        %v786 = vsel %vm766, %v620, 0
        %v789 = vsel %vm766, %v621, 0
        %v792 = vsel %vm766, %v622, 0
        %v795 = vsel %vm766, %v623, 0
        %v798 = vsel %vm766, %v624, 0
        %v801 = vsel %vm766, %v625, 0
        %v804 = vsel %vm766, %v626, 0
        %v807 = vsel %vm766, %v627, 0
        %v810 = vsel %vm766, %v628, 0
        %v813 = vsel %vm766, %v629, 0
        %v816 = vsel %vm766, %v630, 0
        %v819 = vsel %vm766, %v631, 0
        %v822 = vsel %vm766, %v632, 0
        %v825 = vsel %vm766, %v633, 0
        %v828 = vsel %vm766, %v634, 0
        %v831 = vsel %vm766, %v635, 0
        %v834 = vsel %vm766, %v636, 0
        %v837 = vsel %vm766, %v637, 0
        %v840 = vsel %vm766, %v638, 0
        %v843 = vsel %vm766, %v639, 0
        %v846 = vsel %vm766, %v640, 0
        %v849 = vsel %vm766, %v641, 0
        %v852 = vsel %vm766, %v642, 0
        %v855 = vsel %vm766, %v643, 0
        %v858 = vsel %vm766, %v644, 0
        %v861 = vsel %vm766, %v645, 0
        %v864 = vsel %vm766, %v646, 0
        %v867 = vsel %vm766, %v647, 0
        %v870 = vsel %vm766, %v648, 0
        %v873 = vsel %vm766, %v649, 0
        %875 = vmatprep.subr.mxu0 0.0
        %876 = vmatpush1.xpose.msra.mxu0 %v825
        %877 = vmatprep.subr.mxu0 0.0
        %878 = vmatpush1.xpose.msra.mxu0 %v822
        %879 = vmatprep.subr.mxu0 0.0
        %880 = vmatpush1.xpose.msra.mxu0 %v819
        %881 = vmatprep.subr.mxu0 0.0
        %882 = vmatpush1.xpose.msra.mxu0 %v816
        %883 = vmatprep.subr.mxu0 0.0
        %884 = vmatpush1.xpose.msra.mxu0 %v813
        %885 = vmatprep.subr.mxu0 0.0
        %886 = vmatpush1.xpose.msra.mxu0 %v810
        %887 = vmatprep.subr.mxu0 0.0
        %888 = vmatpush1.xpose.msra.mxu0 %v807
        %889 = vmatprep.subr.mxu0 0.0
        %890 = vmatpush1.xpose.msra.mxu0 %v804
        %891 = vmatprep.subr.mxu0 0.0
        %892 = vmatpush1.xpose.msra.mxu0 %v801
        %893 = vmatprep.subr.mxu0 0.0
        %894 = vmatpush1.xpose.msra.mxu0 %v798
        %895 = vmatprep.subr.mxu0 0.0
        %896 = vmatpush1.xpose.msra.mxu0 %v795
        %897 = vmatprep.subr.mxu0 0.0
        %898 = vmatpush1.xpose.msra.mxu0 %v792
        %899 = vmatprep.subr.mxu0 0.0
        %900 = vmatpush1.xpose.msra.mxu0 %v789
        %901 = vmatprep.subr.mxu0 0.0
        %902 = vmatpush1.xpose.msra.mxu0 %v786
        %903 = vmatprep.subr.mxu0 0.0
        %904 = vmatpush1.xpose.msra.mxu0 %v783
        %905 = vmatprep.subr.mxu0 0.0
        %906 = vmatpush1.xpose.msra.mxu0 %v780
        %907 = vmatprep.subr.mxu0 0.0
        %908 = vmatpush2.xpose.msra.mxu0 %v873
        %909 = vmatprep.subr.mxu0 0.0
        %910 = vmatpush2.xpose.msra.mxu0 %v870
        %911 = vmatprep.subr.mxu0 0.0
        %912 = vmatpush2.xpose.msra.mxu0 %v867
        %913 = vmatprep.subr.mxu0 0.0
        %914 = vmatpush2.xpose.msra.mxu0 %v864
        %915 = vmatprep.subr.mxu0 0.0
        %916 = vmatpush2.xpose.msra.mxu0 %v861
        %917 = vmatprep.subr.mxu0 0.0
        %918 = vmatpush2.xpose.msra.mxu0 %v858
        %919 = vmatprep.subr.mxu0 0.0
        %920 = vmatpush2.xpose.msra.mxu0 %v855
        %921 = vmatprep.subr.mxu0 0.0
        %922 = vmatpush2.xpose.msra.mxu0 %v852
        %923 = vmatprep.subr.mxu0 0.0
        %924 = vmatpush2.xpose.msra.mxu0 %v849
        %925 = vmatprep.subr.mxu0 0.0
        %926 = vmatpush2.xpose.msra.mxu0 %v846
        %927 = vmatprep.subr.mxu0 0.0
        %928 = vmatpush2.xpose.msra.mxu0 %v843
        %929 = vmatprep.subr.mxu0 0.0
        %930 = vmatpush2.xpose.msra.mxu0 %v840
        %931 = vmatprep.subr.mxu0 0.0
        %932 = vmatpush2.xpose.msra.mxu0 %v837
        %933 = vmatprep.subr.mxu0 0.0
        %934 = vmatpush2.xpose.msra.mxu0 %v834
        %935 = vmatprep.subr.mxu0 0.0
        %936 = vmatpush2.xpose.msra.mxu0 %v831
        %937 = vmatprep.subr.mxu0 0.0
        %938 = vmatpush2.xpose.msra.mxu0 %v828
        %939 = vmatprep.mubr.f32.mxu0 0.0
        %940 = vmatmul.mubr.f32.gmra.mxu0 %v768
        %v941 = vpop.f32.mrf.mxu0
        %v942 = vadd.f32 0.0, %v941
        %v943 = vpop.f32.mrf.mxu0
        %v944 = vadd.f32 0.0, %v943
        %945 = vmatprep.mubr.f32.mxu0 0.0
        %946 = vmatmul.mubr.f32.gmra.mxu0 %v771
        %v947 = vpop.f32.mrf.mxu0
        %v948 = vadd.f32 0.0, %v947
        %v949 = vpop.f32.mrf.mxu0
        %v950 = vadd.f32 0.0, %v949
        %951 = vmatprep.mubr.f32.mxu0 0.0
        %952 = vmatmul.mubr.f32.gmra.mxu0 %v774
        %v953 = vpop.f32.mrf.mxu0
        %v954 = vadd.f32 0.0, %v953
        %v955 = vpop.f32.mrf.mxu0
        %v956 = vadd.f32 0.0, %v955
        %957 = vmatprep.mubr.f32.mxu0 0.0
        %958 = vmatmul.mubr.f32.gmra.mxu0 %v777
        %v959 = vpop.f32.mrf.mxu0
        %v960 = vadd.f32 0.0, %v959
        %v961 = vpop.f32.mrf.mxu0
        %v962 = vadd.f32 0.0, %v961
        %963 = vdwg.mxu0
        %v964 = vlaneseq
        %v965 = vshrl.u32 %v964, 7
        %v966 = vadd.s32 %v965, 8
        %v967 = vadd.s32 %v965, 16
        %v968 = vadd.s32 %v965, 24
        %v969 = vlaneseq
        %v970 = vand.u32 %v969, 127
        %v971 = vadd.s32 %v970, 128
        %v972 = vmul.u32 %v965, 8
        %v973 = vmul.u32 %v966, 8
        %v974 = vmul.u32 %v967, 8
        %v975 = vmul.u32 %v968, 8
        %vm976 = vcmp.ge.s32.totalorder %v970, %v972
        %vm977 = vcmp.ge.s32.totalorder %v971, %v972
        %vm978 = vcmp.ge.s32.totalorder %v970, %v973
        %vm979 = vcmp.ge.s32.totalorder %v971, %v973
        %vm980 = vcmp.ge.s32.totalorder %v970, %v974
        %vm981 = vcmp.ge.s32.totalorder %v971, %v974
        %vm982 = vcmp.ge.s32.totalorder %v970, %v975
        %vm983 = vcmp.ge.s32.totalorder %v971, %v975
        %v984 = vadd.s32 %v965, 1
        %v985 = vadd.s32 %v966, 1
        %v986 = vadd.s32 %v967, 1
        %v987 = vadd.s32 %v968, 1
        %v988 = vmul.u32 %v984, 8
        %v989 = vmul.u32 %v985, 8
        %v990 = vmul.u32 %v986, 8
        %v991 = vmul.u32 %v987, 8
        %vm992 = vcmp.lt.s32.totalorder %v970, %v988
        %vm993 = vcmp.lt.s32.totalorder %v971, %v988
        %vm994 = vcmp.lt.s32.totalorder %v970, %v989
        %vm995 = vcmp.lt.s32.totalorder %v971, %v989
        %vm996 = vcmp.lt.s32.totalorder %v970, %v990
        %vm997 = vcmp.lt.s32.totalorder %v971, %v990
        %vm998 = vcmp.lt.s32.totalorder %v970, %v991
        %vm999 = vcmp.lt.s32.totalorder %v971, %v991
        %vm1000 = vmand %vm976, %vm992
        %vm1001 = vmand %vm977, %vm993
        %vm1002 = vmand %vm978, %vm994
        %vm1003 = vmand %vm979, %vm995
        %vm1004 = vmand %vm980, %vm996
        %vm1005 = vmand %vm981, %vm997
        %vm1006 = vmand %vm982, %vm998
        %vm1007 = vmand %vm983, %vm999
        %v1008 = vld [vmem:[%s337] sm:$0x3]
        %vm1009 = vcmp.gt.f32.partialorder %v1008, 0.0
        %v1010 = vsel %vm1009, 1, 0
        %v1011 = vlaneseq
        %v1012 = vshrl.u32 %v1011, 7
        %v1013 = vsub.s32 0, %v1012
        %v1014 = vrot.slane %v1010, %v1013
        %v1015 = vlaneseq
        %v1016 = vshrl.u32 %v1015, 7
        %v1017 = vsub.s32 1, %v1016
        %v1018 = vrot.slane %v1010, %v1017
        %vm1019 = vcmp.eq.s32.totalorder %v1014, 1
        %vm1020 = vcmp.eq.s32.totalorder %v1018, 1
        %vm1021 = vmand %vm1000, %vm1019
        %vm1022 = vmand %vm1001, %vm1020
        %vm1023 = vmand %vm1002, %vm1019
        %vm1024 = vmand %vm1003, %vm1020
        %vm1025 = vmand %vm1004, %vm1019
        %vm1026 = vmand %vm1005, %vm1020
        %vm1027 = vmand %vm1006, %vm1019
        %vm1028 = vmand %vm1007, %vm1020
        %v1029 = vsel %vm1000, -1e+09, -2e+09
        %v1030 = vsel %vm1001, -1e+09, -2e+09
        %v1031 = vsel %vm1002, -1e+09, -2e+09
        %v1032 = vsel %vm1003, -1e+09, -2e+09
        %v1033 = vsel %vm1004, -1e+09, -2e+09
        %v1034 = vsel %vm1005, -1e+09, -2e+09
        %v1035 = vsel %vm1006, -1e+09, -2e+09
        %v1036 = vsel %vm1007, -1e+09, -2e+09
        %v1037 = vsel %vm1021, %v942, %v1029
        %v1038 = vsel %vm1022, %v944, %v1030
        %v1039 = vsel %vm1023, %v948, %v1031
        %v1040 = vsel %vm1024, %v950, %v1032
        %v1041 = vsel %vm1025, %v954, %v1033
        %v1042 = vsel %vm1026, %v956, %v1034
        %v1043 = vsel %vm1027, %v960, %v1035
        %v1044 = vsel %vm1028, %v962, %v1036
        %v1045 = vmax.f32 %v1037, %v1038
        %1046 = vmax.xlane.f32.xlu0 %v1045
        %v1047 = vpop.xlane.xlu0 %1046
        %v1048 = vmax.f32 %v1039, %v1040
        %1049 = vmax.xlane.f32.xlu0 %v1048
        %v1050 = vpop.xlane.xlu0 %1049
        %v1051 = vmax.f32 %v1041, %v1042
        %1052 = vmax.xlane.f32.xlu0 %v1051
        %v1053 = vpop.xlane.xlu0 %1052
        %v1054 = vmax.f32 %v1043, %v1044
        %1055 = vmax.xlane.f32.xlu0 %v1054
        %v1056 = vpop.xlane.xlu0 %1055
        %v1057 = vsub.f32 %v1037, %v1047
        %v1058 = vsub.f32 %v1038, %v1047
        %v1059 = vsub.f32 %v1039, %v1050
        %v1060 = vsub.f32 %v1040, %v1050
        %v1061 = vsub.f32 %v1041, %v1053
        %v1062 = vsub.f32 %v1042, %v1053
        %v1063 = vsub.f32 %v1043, %v1056
        %v1064 = vsub.f32 %v1044, %v1056
        %v1065 = vmul.f32 %v1057, 1.442695
        %v1066 = vpow.pop %v1065
        %v1067 = vmul.f32 %v1058, 1.442695
        %v1068 = vpow.pop %v1067
        %v1069 = vmul.f32 %v1059, 1.442695
        %v1070 = vpow.pop %v1069
        %v1071 = vmul.f32 %v1060, 1.442695
        %v1072 = vpow.pop %v1071
        %v1073 = vmul.f32 %v1061, 1.442695
        %v1074 = vpow.pop %v1073
        %v1075 = vmul.f32 %v1062, 1.442695
        %v1076 = vpow.pop %v1075
        %v1077 = vmul.f32 %v1063, 1.442695
        %v1078 = vpow.pop %v1077
        %v1079 = vmul.f32 %v1064, 1.442695
        %v1080 = vpow.pop %v1079
        %v1081 = vadd.f32 %v1066, %v1068
        %1082 = vadd.xlane.f32.xlu0 %v1081
        %v1083 = vpop.xlane.xlu0 %1082
        %v1084 = vadd.f32 %v1070, %v1072
        %1085 = vadd.xlane.f32.xlu0 %v1084
        %v1086 = vpop.xlane.xlu0 %1085
        %v1087 = vadd.f32 %v1074, %v1076
        %1088 = vadd.xlane.f32.xlu0 %v1087
        %v1089 = vpop.xlane.xlu0 %1088
        %v1090 = vadd.f32 %v1078, %v1080
        %1091 = vadd.xlane.f32.xlu0 %v1090
        %v1092 = vpop.xlane.xlu0 %1091
        %v1093 = vrcp.pop %v1083
        %v1094 = vrcp.pop %v1086
        %v1095 = vrcp.pop %v1089
        %v1096 = vrcp.pop %v1092
        %v1097 = vmul.f32 %v1066, %v1093
        %v1098 = vmul.f32 %v1068, %v1093
        %v1099 = vmul.f32 %v1070, %v1094
        %v1100 = vmul.f32 %v1072, %v1094
        %v1101 = vmul.f32 %v1074, %v1095
        %v1102 = vmul.f32 %v1076, %v1095
        %v1103 = vmul.f32 %v1078, %v1096
        %v1104 = vmul.f32 %v1080, %v1096
        %1105 = vmatprep.subr.mxu0 0.0
        %1106 = vmatpush1.msra.mxu0 %v356
        %1107 = vmatprep.subr.mxu0 0.0
        %1108 = vmatpush1.msra.mxu0 %v355
        %1109 = vmatprep.subr.mxu0 0.0
        %1110 = vmatpush1.msra.mxu0 %v354
        %1111 = vmatprep.subr.mxu0 0.0
        %1112 = vmatpush1.msra.mxu0 %v353
        %1113 = vmatprep.subr.mxu0 0.0
        %1114 = vmatpush1.msra.mxu0 %v352
        %1115 = vmatprep.subr.mxu0 0.0
        %1116 = vmatpush1.msra.mxu0 %v351
        %1117 = vmatprep.subr.mxu0 0.0
        %1118 = vmatpush1.msra.mxu0 %v350
        %1119 = vmatprep.subr.mxu0 0.0
        %1120 = vmatpush1.msra.mxu0 %v349
        %1121 = vmatprep.subr.mxu0 0.0
        %1122 = vmatpush1.msra.mxu0 %v348
        %1123 = vmatprep.subr.mxu0 0.0
        %1124 = vmatpush1.msra.mxu0 %v347
        %1125 = vmatprep.subr.mxu0 0.0
        %1126 = vmatpush1.msra.mxu0 %v346
        %1127 = vmatprep.subr.mxu0 0.0
        %1128 = vmatpush1.msra.mxu0 %v345
        %1129 = vmatprep.subr.mxu0 0.0
        %1130 = vmatpush1.msra.mxu0 %v344
        %1131 = vmatprep.subr.mxu0 0.0
        %1132 = vmatpush1.msra.mxu0 %v343
        %1133 = vmatprep.subr.mxu0 0.0
        %1134 = vmatpush1.msra.mxu0 %v342
        %1135 = vmatprep.subr.mxu0 0.0
        %1136 = vmatpush1.msra.mxu0 %v341
        %1137 = vmatprep.subr.mxu0 0.0
        %1138 = vmatpush2.msra.mxu0 %v372
        %1139 = vmatprep.subr.mxu0 0.0
        %1140 = vmatpush2.msra.mxu0 %v371
        %1141 = vmatprep.subr.mxu0 0.0
        %1142 = vmatpush2.msra.mxu0 %v370
        %1143 = vmatprep.subr.mxu0 0.0
        %1144 = vmatpush2.msra.mxu0 %v369
        %1145 = vmatprep.subr.mxu0 0.0
        %1146 = vmatpush2.msra.mxu0 %v368
        %1147 = vmatprep.subr.mxu0 0.0
        %1148 = vmatpush2.msra.mxu0 %v367
        %1149 = vmatprep.subr.mxu0 0.0
        %1150 = vmatpush2.msra.mxu0 %v366
        %1151 = vmatprep.subr.mxu0 0.0
        %1152 = vmatpush2.msra.mxu0 %v365
        %1153 = vmatprep.subr.mxu0 0.0
        %1154 = vmatpush2.msra.mxu0 %v364
        %1155 = vmatprep.subr.mxu0 0.0
        %1156 = vmatpush2.msra.mxu0 %v363
        %1157 = vmatprep.subr.mxu0 0.0
        %1158 = vmatpush2.msra.mxu0 %v362
        %1159 = vmatprep.subr.mxu0 0.0
        %1160 = vmatpush2.msra.mxu0 %v361
        %1161 = vmatprep.subr.mxu0 0.0
        %1162 = vmatpush2.msra.mxu0 %v360
        %1163 = vmatprep.subr.mxu0 0.0
        %1164 = vmatpush2.msra.mxu0 %v359
        %1165 = vmatprep.subr.mxu0 0.0
        %1166 = vmatpush2.msra.mxu0 %v358
        %1167 = vmatprep.subr.mxu0 0.0
        %1168 = vmatpush2.msra.mxu0 %v357
        %1169 = vmatprep.mubr.f32.mxu0 %v1098
        %1170 = vmatmul.mubr.f32.gmra.mxu0 %v1097
        %v1171 = vpop.f32.mrf.mxu0
        %v1172 = vadd.f32 0.0, %v1171
        %v1173 = vpop.f32.mrf.mxu0
        %1174 = vmatprep.mubr.f32.mxu0 %v1100
        %1175 = vmatmul.mubr.f32.gmra.mxu0 %v1099
        %v1176 = vpop.f32.mrf.mxu0
        %v1177 = vadd.f32 0.0, %v1176
        %v1178 = vpop.f32.mrf.mxu0
        %1179 = vmatprep.mubr.f32.mxu0 %v1102
        %1180 = vmatmul.mubr.f32.gmra.mxu0 %v1101
        %v1181 = vpop.f32.mrf.mxu0
        %v1182 = vadd.f32 0.0, %v1181
        %v1183 = vpop.f32.mrf.mxu0
        %1184 = vmatprep.mubr.f32.mxu0 %v1104
        %1185 = vmatmul.mubr.f32.gmra.mxu0 %v1103
        %v1186 = vpop.f32.mrf.mxu0
        %v1187 = vadd.f32 0.0, %v1186
        %v1188 = vpop.f32.mrf.mxu0
        %1189 = vdwg.mxu0
        %1190 = vst.msk [vmem:[%s326] sm:$0xff] %vm408, %v1172
        %1191 = vst.msk [vmem:[%s326 + $0x8] sm:$0xff] %vm408, %v1177
        %1192 = vst.msk [vmem:[%s326 + $0x10] sm:$0xff] %vm408, %v1182
        %1193 = vst.msk [vmem:[%s326 + $0x18] sm:$0xff] %vm408, %v1187
        %s1194 = sand.u32 %s194, 1
        %s1195 = scalar_lea.sflag [#allocation4], %s1194
        %s1196 = sand.u32 %s194, 1
        %s1197 = smul.addr %s1196, 32
        %s1198 = scalar_lea.vmem [#allocation5], %s1197
        // Predicated region
        $region53: #{attention_pallas.1} parent=47 // pred_check
          %p1199 = pneg %p204
        $region54: #{attention_pallas.1} parent=47 // pred_check_branch
          %1201 = sbr.rel (%p1199) target = $region56
        $region55: #{attention_pallas.1} parent=47 // pred_region
          %s1202 = smul.u32 4, %s24
          %s1204 = ssub.s32 512, 512
          %1205 = vsyncadd %s1195, %s1204
          %s1206 = smul.addr %s1202, 128
          %s1207 = scalar_lea.hbm %s7, %s1206
          %s1208 = sshll.u32 %s1198, 4
          %s1209 = int_to_ptr.vmem [resolvable:$true] %s1208
          %1214 = dma.vmem_to_hbm [thread:$0]  %s1209, 512, %s1207, %s1195, 128, 128, 8
        $region56: #{attention_pallas.1} parent=47 // pred_fallthru
          _
      $region48: #{attention_pallas.1} parent=5 // pred_fallthru
        _
      %p1215 = scmp.le.s32.totalorder 2, %s19
      // Predicated region
      $region57: #{attention_pallas.1} parent=5 // pred_check
        %p1216 = pneg %p1215
      $region58: #{attention_pallas.1} parent=5 // pred_check_branch
        %1218 = sbr.rel (%p1216) target = $region60
      $region59: #{attention_pallas.1} parent=5 // pred_region
        %s1219 = ssub.s32 %s19, 2
        // Predicated region
        $region61: #{attention_pallas.1} parent=59 // pred_check
          %p1220 = pneg %p210
        $region62: #{attention_pallas.1} parent=59 // pred_check_branch
          %1222 = sbr.rel (%p1220) target = $region64
        $region63: #{attention_pallas.1} parent=59 // pred_region
          %s1223 = sand.u32 %s195, 1
          %s1224 = scalar_lea.sflag [#allocation4], %s1223
          %s1225 = sand.u32 %s195, 1
          %s1226 = smul.addr %s1225, 32
          %s1227 = scalar_lea.vmem [#allocation5], %s1226
          %1228 = dma.done %s1224, 512
        $region64: #{attention_pallas.1} parent=59 // pred_fallthru
          _
      $region60: #{attention_pallas.1} parent=5 // pred_fallthru
        _
    $region6: #{attention_pallas.1} parent=1 // loop_footer
      %s23 = sadd.s32 1, %s19
    $region7: #{attention_pallas.1} parent=1 // loop_footer_branch
      %18 = sbr.rel target = $region3
    $region8: #{attention_pallas.1} parent=1 // loop_exit
      _
    %1229 = vsyncpa [#allocation3], 1
    %s1230 = scalar_lea.sflag [#allocation3], 1
    %1231 = vsyncpa %s1230, 1
    %1232 = vsyncpa [#allocation4], 1
    %s1233 = scalar_lea.sflag [#allocation4], 1
    %1234 = vsyncpa %s1233, 1

</llo_original>
